<compile_context>
chip_gen: v7x
topology: tpu7x:2x2x1
jax: 0.10.0
libtpu: 0.0.40
codegen_flags: <defaults>
</compile_context>

<pallas_src>
import numpy as np
import jax
import jax.numpy as jnp
from jax.experimental import pallas as pl
from jax.experimental.pallas import tpu as pltpu


def _round_up(x, m):
    return ((x + m - 1) // m) * m


def _block_spec(shape, index_map, *, single_buffered=False):
    """BlockSpec helper: optionally single-buffer a grid-constant operand.

    Falls back to a default (double-buffered) BlockSpec if this jax version's
    BlockSpec does not accept `pipeline_mode` -- this is a pure VMEM-footprint
    optimization and never affects correctness."""
    if single_buffered:
        try:
            return pl.BlockSpec(shape, index_map, pipeline_mode=pl.Buffered(1))
        except TypeError:
            pass
    return pl.BlockSpec(shape, index_map)


# ----------------------------- Pallas kernel -------------------------------
def _mfc_kernel(x_ref, w_ref, shift_ref, o_ref):
    # MXU matmul with f32 accumulation + single fused affine shift epilogue
    # (folded Linear bias + BatchNorm eval-mode scale/shift), kept in f32.
    y = jnp.dot(x_ref[...], w_ref[...], preferred_element_type=jnp.float32)
    y = y + shift_ref[...]                   # (1, tn) broadcast over batch tile
    # TODO(synk): training-mode dropout (random mask + 1/(1-p) scaling) and BN
    # batch statistics are not implemented; eval mode only (dropout = identity).
    o_ref[...] = y.astype(o_ref.dtype)


# --------------------- one-time parameter folding (host) --------------------
def fold_mfc_params(weight_t, bias, bn_scale, bn_shift, *, weight_dtype=None):
    """Fold Linear bias + BatchNorm1d(eval) affine into the weight and a single
    f32 shift row, and pad D_out to a lane multiple (128) so kernel stores are
    lane-dense.  Call ONCE at parameter-load time, NOT per forward.

    Returns (w_folded_padded, shift_row_f32, d_out).
    Pass weight_dtype=jnp.bfloat16 on v6e/v7x to halve weight HBM traffic
    (MXU still accumulates in f32; small numerics change)."""
    f32 = jnp.float32
    d_in, d_out = weight_t.shape
    scale = bn_scale.astype(f32)
    w = weight_t.astype(f32) * scale[None, :]
    shift = (bn_shift.astype(f32) + bias.astype(f32) * scale).reshape(1, d_out)

    d_out_p = _round_up(max(d_out, 128), 128)
    if d_out_p != d_out:
        w = jnp.pad(w, ((0, 0), (0, d_out_p - d_out)))
        shift = jnp.pad(shift, ((0, 0), (0, d_out_p - d_out)))

    wd = weight_dtype if weight_dtype is not None else weight_t.dtype
    return w.astype(wd), shift, d_out


# ------------------------------ forward wrapper -----------------------------
def mfc_forward(x, w_folded, shift_row, d_out, *, block_b=512, block_n=512):
    """Fused Linear(+folded bias/BN) forward.

    x:         (B, D_in)
    w_folded:  (D_in, D_out_p)   from fold_mfc_params (D_out padded to 128)
    shift_row: (1, D_out_p) f32  folded bias + BN shift
    d_out:     original (unpadded) output feature count
    """
    B, D_in = x.shape
    D_in_w, D_out_p = w_folded.shape
    assert D_in == D_in_w, "weight/input feature mismatch"

    # ---- batch: pad only to the sublane multiple (8), tile adaptively ----
    B_p = _round_up(B, 8)
    x_p = jnp.pad(x, ((0, B_p - B), (0, 0))) if B_p != B else x

    nb = pl.cdiv(B_p, block_b)
    tm = _round_up(pl.cdiv(B_p, nb), 8)         # balanced, sublane-aligned tiles
    grid_b = pl.cdiv(B_p, tm)

    # ---- D_out: tile so the folded weight never sits fully resident ----
    nn = pl.cdiv(D_out_p, block_n)
    tn = _round_up(pl.cdiv(D_out_p, nn), 128)   # balanced, lane-aligned tiles
    grid_n = pl.cdiv(D_out_p, tn)

    # Megacore (v7x): a single-step grid leaves one TensorCore idle; if there
    # is a meaningful amount of batch work, split the batch into two tiles.
    if grid_b == 1 and grid_n == 1 and B_p >= 16:
        tm = _round_up(pl.cdiv(B_p, 2), 8)
        grid_b = pl.cdiv(B_p, tm)

    # Weight/shift are grid-constant iff there is a single D_out tile; a
    # second pipeline buffer would then be pure VMEM waste.
    w_const = (grid_n == 1)
    w_bufs = 1 if w_const else 2

    itemsize = x.dtype.itemsize
    required = (2 * tm * D_in * itemsize                       # x tiles (dbl buf)
                + w_bufs * D_in * tn * w_folded.dtype.itemsize # weight tiles
                + w_bufs * tn * 4                              # shift rows
                + 2 * tm * tn * itemsize)                      # out tiles
    vmem_limit = int(min(64 << 20, max(2 * required + (1 << 20), 16 << 20)))

    cost = pl.CostEstimate(
        flops=2 * B_p * D_in * D_out_p,
        transcendentals=0,
        bytes_accessed=(B_p * D_in * itemsize
                        + D_in * D_out_p * w_folded.dtype.itemsize
                        + D_out_p * 4
                        + B_p * D_out_p * itemsize),
    )

    out_p = pl.pallas_call(
        _mfc_kernel,
        out_shape=jax.ShapeDtypeStruct((B_p, D_out_p), x.dtype),
        grid_spec=pltpu.PrefetchScalarGridSpec(
            num_scalar_prefetch=0,
            grid=(grid_b, grid_n),
            in_specs=[
                pl.BlockSpec((tm, D_in), lambda i, j: (i, 0)),        # x (full K)
                _block_spec((D_in, tn), lambda i, j: (0, j),
                            single_buffered=w_const),                 # folded W
                _block_spec((1, tn), lambda i, j: (0, j),
                            single_buffered=w_const),                 # folded shift
            ],
            out_specs=pl.BlockSpec((tm, tn), lambda i, j: (i, j)),
        ),
        compiler_params=pltpu.CompilerParams(
            dimension_semantics=("parallel", "parallel"),
            vmem_limit_bytes=vmem_limit,
        ),
        cost_estimate=cost,
    )(x_p, w_folded, shift_row)

    return out_p[:B, :d_out]


# ----------------------------- Parameter setup ------------------------------
def make_mfc_params(key, fc_layers, have_bn=False, have_last_bn=False,
                    dtype=jnp.float32):
    """Deterministic init matching MFC.__init__ / xavier_init_fc."""
    d_in, d_out = fc_layers[0], fc_layers[1]
    r = np.sqrt(6.0) / np.sqrt(d_in + d_out)          # xavier_init_fc
    # PyTorch weight is (d_out, d_in); we store the transpose (d_in, d_out).
    w = jax.random.uniform(key, (d_in, d_out), dtype=dtype, minval=-r, maxval=r)
    b = jnp.zeros((d_out,), dtype=dtype)              # bias.fill_(0)

    if have_bn and have_last_bn:
        # Fresh BatchNorm1d (eval mode): gamma=1, beta=0, mean=0, var=1, eps=1e-5
        gamma = jnp.ones((d_out,), dtype=dtype)
        beta = jnp.zeros((d_out,), dtype=dtype)
        running_mean = jnp.zeros((d_out,), dtype=dtype)
        running_var = jnp.ones((d_out,), dtype=dtype)
        eps = 1e-5
        scale = gamma / jnp.sqrt(running_var + eps)
        shift = beta - running_mean * scale
    else:
        scale = jnp.ones((d_out,), dtype=dtype)
        shift = jnp.zeros((d_out,), dtype=dtype)
    return w, b, scale, shift


# --------------------------------- Main -------------------------------------
if __name__ == "__main__":
    key = jax.random.PRNGKey(0)
    k_w, k_x = jax.random.split(key)

    fc_layers = (32, 64)          # (in_features, out_features)
    B = 8                         # batch

    w_t, bias, bn_scale, bn_shift = make_mfc_params(
        k_w, fc_layers, have_bn=True, have_last_bn=True)

    # Fold ONCE at parameter-load time (bias + BN(eval) -> weight + shift row,
    # D_out padded to 128). The per-call path below does no weight-side work.
    w_folded, shift_row, d_out = fold_mfc_params(w_t, bias, bn_scale, bn_shift)

    x = jax.random.normal(k_x, (B, fc_layers[0]), dtype=jnp.float32)

    out = mfc_forward(x, w_folded, shift_row, d_out)
    out = jax.block_until_ready(out)
    assert out.shape == (B, fc_layers[1])

    # Reference check in plain JAX (unfolded math: Linear -> BN(eval) -> dropout(eval)).
    ref = (x @ w_t + bias) * bn_scale + bn_shift
    np.testing.assert_allclose(np.asarray(out), np.asarray(ref),
                               rtol=1e-5, atol=1e-5)

    print("KERNEL_OK")
</pallas_src>

<mosaic_0001>
module attributes {stable_mosaic.version = 11 : i64} {
  func.func @_mfc_kernel(%arg0: i32, %arg1: i32, %arg2: memref<8x32xf32, #tpu.memory_space<vmem>>, %arg3: memref<32x128xf32, #tpu.memory_space<vmem>>, %arg4: memref<1x128xf32, #tpu.memory_space<vmem>>, %arg5: memref<8x128xf32, #tpu.memory_space<vmem>>) attributes {dimension_semantics = [#tpu.dimension_semantics<parallel>, #tpu.dimension_semantics<parallel>], iteration_bounds = array<i64: 1, 1>, scalar_prefetch = 0 : i64, scratch_operands = 0 : i64, tpu.core_type = #tpu.core_type<tc>, window_params = [{transform_indices = @transform_0, window_bounds = array<i64: 8, 32>}, {pipeline_mode = #tpu.pipeline_mode<synchronous>, transform_indices = @transform_1, window_bounds = array<i64: 32, 128>}, {pipeline_mode = #tpu.pipeline_mode<synchronous>, transform_indices = @transform_2, window_bounds = array<i64: 1, 128>}, {transform_indices = @transform_3, window_bounds = array<i64: 8, 128>}]} {
    %c0 = arith.constant 0 : index
    %c0_0 = arith.constant 0 : index
    %0 = vector.load %arg2[%c0, %c0_0] : memref<8x32xf32, #tpu.memory_space<vmem>>, vector<8x32xf32>
    %c0_1 = arith.constant 0 : index
    %c0_2 = arith.constant 0 : index
    %1 = vector.load %arg3[%c0_1, %c0_2] : memref<32x128xf32, #tpu.memory_space<vmem>>, vector<32x128xf32>
    %cst = arith.constant dense<0.000000e+00> : vector<8x128xf32>
    %2 = tpu.matmul %0, %1, %cst {dimension_numbers = #tpu.dot_dimension_numbers<[1], [0], [0], [1], [0, 0, 1, 1], [], []>} : vector<8x32xf32>, vector<32x128xf32>, vector<8x128xf32> -> vector<8x128xf32>
    %c0_3 = arith.constant 0 : index
    %c0_4 = arith.constant 0 : index
    %3 = vector.load %arg4[%c0_3, %c0_4] : memref<1x128xf32, #tpu.memory_space<vmem>>, vector<1x128xf32>
    %4 = vector.broadcast %3 : vector<1x128xf32> to vector<8x128xf32>
    %5 = arith.addf %2, %4 : vector<8x128xf32>
    %c0_5 = arith.constant 0 : index
    %c0_6 = arith.constant 0 : index
    %6 = vector.load %arg5[%c0_5, %c0_6] : memref<8x128xf32, #tpu.memory_space<vmem>>, vector<8x128xf32>
    tpu.vector_store %arg5[%c0_5, %c0_6], %5 {strides = array<i32>} : memref<8x128xf32, #tpu.memory_space<vmem>>, vector<8x128xf32>,
    return
  }
  func.func @transform_0(%arg0: i32, %arg1: i32) -> (i32, i32) {
    %c0_i32 = arith.constant 0 : i32
    %c0_i32_0 = arith.constant 0 : i32
    return %arg0, %c0_i32 : i32, i32
  }
  func.func @transform_1(%arg0: i32, %arg1: i32) -> (i32, i32) {
    %c0_i32 = arith.constant 0 : i32
    %c0_i32_0 = arith.constant 0 : i32
    return %c0_i32, %arg1 : i32, i32
  }
  func.func @transform_2(%arg0: i32, %arg1: i32) -> (i32, i32) {
    %c0_i32 = arith.constant 0 : i32
    %c0_i32_0 = arith.constant 0 : i32
    return %c0_i32, %arg1 : i32, i32
  }
  func.func @transform_3(%arg0: i32, %arg1: i32) -> (i32, i32) {
    %c0_i32 = arith.constant 0 : i32
    return %arg0, %arg1 : i32, i32
  }
}

</mosaic_0001>

<llo_original>
// kernel: tpu_custom_call.1
$region0: #{tpu_custom_call.1}
  #allocation0 [shape = 'u32[]', space=smem, size = 0x4, offset = 0x4, fixed_abs, tag = 'smem constant byte address 0x4 - core index']
  #allocation1 [shape = 'u32[144,128]{1,0:T(1,128)}', space=vmem, size = 0x12000, scoped, tag = 'internal scratch']
  %s0 = inlined_call_operand.hbm [shape: f32[8,32], index: 0, kind: input, shape index: {}]
  %s1 = inlined_call_operand.hbm [shape: f32[32,128], index: 1, kind: input, shape index: {}]
  %s2 = inlined_call_operand.vmem [shape: f32[1,128], index: 2, kind: input, shape index: {}]
  %s3 = inlined_call_operand.hbm [shape: f32[8,128], index: 3, kind: output, shape index: {}]
  %s4 = sld [smem:[#allocation0]]
  $region30: #{tpu_custom_call.1} parent=0
    _
  %s6 = ssub.s32 1, %s4
  %s7 = scalar_select 0, %s6, %s4
  $region1: #{tpu_custom_call.1} parent=0
    #allocation2 [shape = 'u8[4096]{0}', space=vmem, size = 0x1000, scoped, tag = 'input window, operand 0, single buffered']
    #allocation3 [shape = 's32[1]{0}', space=sflag, size = 0x4, scoped, tag = 'scoped memory for tpu_custom_call.1']
    #allocation4 [shape = 's32[1]{0}', space=sflag, size = 0x4, scoped, tag = 'scoped memory for tpu_custom_call.1']
    #allocation5 [shape = 'u8[16384]{0}', space=vmem, size = 0x4000, scoped, tag = 'input window, operand 1, single buffered']
    #allocation6 [shape = 's32[1]{0}', space=sflag, size = 0x4, scoped, tag = 'scoped memory for tpu_custom_call.1']
    #allocation7 [shape = 'u8[4096]{0}', space=vmem, size = 0x1000, scoped, tag = 'output window, operand 0, single buffered']
    %8 = vsyncpa [#allocation3], 0
    %9 = vsyncpa [#allocation6], 0
    %10 = vsyncpa [#allocation4], 0
    // Predicated region
    $region2: #{tpu_custom_call.1} parent=1 // pred_check
      _
    $region3: #{tpu_custom_call.1} parent=1 // pred_check_branch
      %12 = sbr.rel (0) target = $region5
    $region4: #{tpu_custom_call.1} parent=1 // pred_region
      %s14 = ssub.s32 128, 128
      %15 = vsyncadd [#allocation3], %s14
      %s17 = sshll.u32 [#allocation2], 4
      %s18 = int_to_ptr.vmem [resolvable:$true] %s17
      %20 = dma.hbm_to_vmem [thread:$0]  %s0, 128, %s18, [#allocation3]
    $region5: #{tpu_custom_call.1} parent=1 // pred_fallthru
      _
    // Predicated region
    $region6: #{tpu_custom_call.1} parent=1 // pred_check
      _
    $region7: #{tpu_custom_call.1} parent=1 // pred_check_branch
      %22 = sbr.rel (0) target = $region9
    $region8: #{tpu_custom_call.1} parent=1 // pred_region
      %s24 = ssub.s32 512, 512
      %25 = vsyncadd [#allocation6], %s24
      %s26 = sshll.u32 [#allocation5], 4
      %s27 = int_to_ptr.vmem [resolvable:$true] %s26
      %32 = dma.hbm_to_vmem [thread:$0]  %s1, 512, %s27, [#allocation6], 128, 128, 8
    $region9: #{tpu_custom_call.1} parent=1 // pred_fallthru
      _
    // Predicated region
    $region10: #{tpu_custom_call.1} parent=1 // pred_check
      _
    $region11: #{tpu_custom_call.1} parent=1 // pred_check_branch
      %34 = sbr.rel (0) target = $region13
    $region12: #{tpu_custom_call.1} parent=1 // pred_region
      _
    $region13: #{tpu_custom_call.1} parent=1 // pred_fallthru
      _
    // Predicated region
    $region14: #{tpu_custom_call.1} parent=1 // pred_check
      _
    $region15: #{tpu_custom_call.1} parent=1 // pred_check_branch
      %36 = sbr.rel (0) target = $region17
    $region16: #{tpu_custom_call.1} parent=1 // pred_region
      %37 = dma.done [#allocation3], 128
    $region17: #{tpu_custom_call.1} parent=1 // pred_fallthru
      _
    // Predicated region
    $region18: #{tpu_custom_call.1} parent=1 // pred_check
      _
    $region19: #{tpu_custom_call.1} parent=1 // pred_check_branch
      %39 = sbr.rel (0) target = $region21
    $region20: #{tpu_custom_call.1} parent=1 // pred_region
      %40 = dma.done [#allocation6], 512
    $region21: #{tpu_custom_call.1} parent=1 // pred_fallthru
      _
    %v41 = vld [vmem:[#allocation2] sm:$0xff]
    %v42 = vld [vmem:[#allocation5] sm:$0xff]
    %v43 = vld [vmem:[#allocation5 + $0x8] sm:$0xff]
    %v44 = vld [vmem:[#allocation5 + $0x10] sm:$0xff]
    %v45 = vld [vmem:[#allocation5 + $0x18] sm:$0xff]
    %v46 = vld [vmem:[%s2] sm:$0x1]
    %v48 = vlaneseq
    %v49 = vshrl.u32 %v48, 7
    %v50 = vsub.s32 0, %v49
    %v51 = vrot.slane %v46, %v50
    %vm53 = vcmask 261120
    %v55 = vsel %vm53, %v41, 0
    %57 = vmatprep.subr.mxu0 0.0
    %58 = vmatpush1.msra.mxu0 %v42
    %59 = vmatprep.subr.mxu0 0.0
    %60 = vmatpush1.msra.mxu0 %v43
    %61 = vmatprep.subr.mxu0 0.0
    %62 = vmatpush1.msra.mxu0 %v44
    %63 = vmatprep.subr.mxu0 0.0
    %64 = vmatpush1.msra.mxu0 %v45
    %65 = vmatprep.subr.mxu0 0.0
    %66 = vmatpush1.msra.mxu0 0.0
    %67 = vmatprep.subr.mxu0 0.0
    %68 = vmatpush1.msra.mxu0 0.0
    %69 = vmatprep.subr.mxu0 0.0
    %70 = vmatpush1.msra.mxu0 0.0
    %71 = vmatprep.subr.mxu0 0.0
    %72 = vmatpush1.msra.mxu0 0.0
    %73 = vmatprep.subr.mxu0 0.0
    %74 = vmatpush1.msra.mxu0 0.0
    %75 = vmatprep.subr.mxu0 0.0
    %76 = vmatpush1.msra.mxu0 0.0
    %77 = vmatprep.subr.mxu0 0.0
    %78 = vmatpush1.msra.mxu0 0.0
    %79 = vmatprep.subr.mxu0 0.0
    %80 = vmatpush1.msra.mxu0 0.0
    %81 = vmatprep.subr.mxu0 0.0
    %82 = vmatpush1.msra.mxu0 0.0
    %83 = vmatprep.subr.mxu0 0.0
    %84 = vmatpush1.msra.mxu0 0.0
    %85 = vmatprep.subr.mxu0 0.0
    %86 = vmatpush1.msra.mxu0 0.0
    %87 = vmatprep.subr.mxu0 0.0
    %88 = vmatpush1.msra.mxu0 0.0
    %89 = vmatprep.subr.mxu0 0.0
    %90 = vmatpush1.msra.mxu0 0.0
    %91 = vmatprep.subr.mxu0 0.0
    %92 = vmatpush1.msra.mxu0 0.0
    %93 = vmatprep.subr.mxu0 0.0
    %94 = vmatpush1.msra.mxu0 0.0
    %95 = vmatprep.subr.mxu0 0.0
    %96 = vmatpush1.msra.mxu0 0.0
    %97 = vmatprep.subr.mxu0 0.0
    %98 = vmatpush1.msra.mxu0 0.0
    %99 = vmatprep.subr.mxu0 0.0
    %100 = vmatpush1.msra.mxu0 0.0
    %101 = vmatprep.subr.mxu0 0.0
    %102 = vmatpush1.msra.mxu0 0.0
    %103 = vmatprep.subr.mxu0 0.0
    %104 = vmatpush1.msra.mxu0 0.0
    %105 = vmatprep.subr.mxu0 0.0
    %106 = vmatpush1.msra.mxu0 0.0
    %107 = vmatprep.subr.mxu0 0.0
    %108 = vmatpush1.msra.mxu0 0.0
    %109 = vmatprep.subr.mxu0 0.0
    %110 = vmatpush1.msra.mxu0 0.0
    %111 = vmatprep.subr.mxu0 0.0
    %112 = vmatpush1.msra.mxu0 0.0
    %113 = vmatprep.subr.mxu0 0.0
    %114 = vmatpush1.msra.mxu0 0.0
    %115 = vmatprep.subr.mxu0 0.0
    %116 = vmatpush1.msra.mxu0 0.0
    %117 = vmatprep.subr.mxu0 0.0
    %118 = vmatpush1.msra.mxu0 0.0
    %119 = vmatprep.subr.mxu0 0.0
    %120 = vmatpush1.msra.mxu0 0.0
    %121 = vmatprep.mubr.f32.mxu0 0.0
    %122 = vmatmul.mubr.f32.gmra.mrb[0].mxu0 %v55
    %v123 = vpop.f32.mrb[0].mxu0
    %v124 = vadd.f32 %v51, %v123
    %v125 = vpop.f32.mrb[0].mxu0
    %126 = vdwg.mxu0
    %127 = vst [vmem:[#allocation7] sm:$0xff] %v124
    // Predicated region
    $region22: #{tpu_custom_call.1} parent=1 // pred_check
      _
    $region23: #{tpu_custom_call.1} parent=1 // pred_check_branch
      %129 = sbr.rel (0) target = $region25
    $region24: #{tpu_custom_call.1} parent=1 // pred_region
      %s131 = ssub.s32 128, 128
      %132 = vsyncadd [#allocation4], %s131
      %s134 = sshll.u32 [#allocation7], 4
      %s135 = int_to_ptr.vmem [resolvable:$true] %s134
      %137 = dma.vmem_to_hbm [thread:$0]  %s135, 128, %s3, [#allocation4]
    $region25: #{tpu_custom_call.1} parent=1 // pred_fallthru
      _
    // Predicated region
    $region26: #{tpu_custom_call.1} parent=1 // pred_check
      _
    $region27: #{tpu_custom_call.1} parent=1 // pred_check_branch
      %139 = sbr.rel (0) target = $region29
    $region28: #{tpu_custom_call.1} parent=1 // pred_region
      %140 = dma.done [#allocation4], 128
    $region29: #{tpu_custom_call.1} parent=1 // pred_fallthru
      _
    %141 = vsyncpa [#allocation3], 1
    %142 = vsyncpa [#allocation6], 1
    %143 = vsyncpa [#allocation4], 1

</llo_original>
